<compile_context>
chip_gen: v5e
topology: v5e:2x2
jax: 0.10.0
libtpu: 0.0.40
codegen_flags: <defaults>
</compile_context>

<pallas_src>
import functools

import jax
import jax.numpy as jnp
from jax import lax
from jax.experimental import pallas as pl
from jax.experimental.pallas import tpu as pltpu

GAMMA = 2.0


def _round_up(x, m):
    return ((x + m - 1) // m) * m


def _vmem_capacity_bytes():
    try:
        return int(pltpu.get_tpu_info().vmem_capacity_bytes)
    except Exception:
        return 128 << 20  # v5e / v6e physical VMEM


def _num_core_splits():
    try:
        info = pltpu.get_tpu_info()
        for attr in ("num_cores", "num_tensorcores", "tensorcore_count", "core_count"):
            v = getattr(info, attr, None)
            if v:
                return max(1, int(v))
    except Exception:
        pass
    return 2  # v7x has 2 TCs; an extra 'parallel' split is harmless on 1-TC chips


def _choose_tile_rows(n, c, itemsize, vmem_budget_bytes, max_rows=4096):
    """Row tile (multiple of 8) under a per-generation VMEM budget.

    Per-row VMEM bytes (corrected accounting):
      * logits block : 2 (double buffer) * C * itemsize   (native-dtype DMA)
      * targets block: 2 * 128 * 4                        ((tile,1) i32 pads to 128 lanes)
      * live f32 body temporaries (x, e, masked product): ~3 * C * 4
    """
    per_row = 2 * c * itemsize + 2 * 128 * 4 + 3 * c * 4
    rows = max(8, (vmem_budget_bytes // per_row) // 8 * 8)
    rows = min(rows, max_rows, _round_up(n, 8))
    return max(8, rows)


def _focal_loss_kernel(logits_ref, tgt_ref, out_ref, *,
                       gamma, n_rows, tile_rows, steps_per_split):
    split = pl.program_id(0)   # "parallel" : megacore split (v7x)
    step = pl.program_id(1)    # "arbitrary": reduction over row tiles

    # Per-split accumulator block stays VMEM-resident across the step axis.
    @pl.when(step == 0)
    def _():
        out_ref[...] = jnp.zeros_like(out_ref)

    x = logits_ref[...].astype(jnp.float32)          # (tile, C) upcast in-vreg
    t = tgt_ref[...]                                 # (tile, 1) int32

    # Numerically-stable softmax pieces: a single exp pass over (tile, C).
    m = jnp.max(x, axis=-1, keepdims=True)           # (tile, 1)
    e = jnp.exp(x - m)                               # (tile, C)  EUP
    sumexp = jnp.sum(e, axis=-1, keepdims=True)      # (tile, 1)  XLU
    # TODO(synk): on v7x, if still EUP-bound after the 2-TC split, move this
    #             cross-lane reduce onto the idle MXU (e @ ones((C, 1), f32)).

    # Target logit via fused select-and-sum (no float one-hot, no 2nd reduce).
    cls_idx = lax.broadcasted_iota(jnp.int32, x.shape, dimension=1)
    x_target = jnp.sum(jnp.where(cls_idx == t, x, 0.0), axis=-1, keepdims=True)
    # TODO(synk): targets outside [0, C) (e.g. PyTorch ignore_index=-100) are
    #             not ignored here; mask explicitly if such inputs are possible.

    ce = jnp.log(sumexp) + m - x_target              # (tile, 1) cross entropy
    pt = jnp.exp(-ce)                                # (tile, 1) cheap per-row EUP

    omp = 1.0 - pt
    if gamma == 2.0:                                 # VALU multiply, not EUP pow
        w = omp * omp
    elif float(gamma).is_integer() and gamma >= 1.0:
        w = omp
        for _ in range(int(gamma) - 1):
            w = w * omp
    else:
        w = jnp.power(omp, gamma)
    focal = w * ce                                   # (tile, 1)

    # Mask rows past the true N (remainder tile and clamped tail blocks).
    blk = split * steps_per_split + step
    row = blk * tile_rows + lax.broadcasted_iota(jnp.int32, focal.shape, dimension=0)
    partial = jnp.sum(jnp.where(row < n_rows, focal, 0.0), axis=(0, 1), keepdims=True)

    out_ref[0, 0:1, 0:1] += partial                  # single live cell of (1,8,128) block


def focal_loss(logits, targets, gamma=GAMMA, max_tile_rows=4096):
    """logits: (N, C) float (any float dtype), targets: (N,) int class indices.
    Returns scalar f32 mean focal loss."""
    n, c = logits.shape
    targets2d = targets.astype(jnp.int32).reshape(n, 1)
    itemsize = jnp.dtype(logits.dtype).itemsize

    capacity = _vmem_capacity_bytes()                # 128 MiB v5e/v6e, 64 MiB v7x
    budget = max(8 << 20, capacity // 8)             # block budget incl. temporaries
    vmem_limit = int(min(capacity // 2, 64 << 20))   # explicit, generation-aware

    tile_n = _choose_tile_rows(n, c, itemsize, budget, max_rows=max_tile_rows)
    num_row_blocks = pl.cdiv(n, tile_n)
    num_splits = max(1, min(_num_core_splits(), num_row_blocks))
    steps_per_split = pl.cdiv(num_row_blocks, num_splits)
    last_blk = num_row_blocks - 1

    # Clamp the block index for tail steps of the last split; the in-kernel
    # row mask (computed from the *unclamped* index) zeroes their contribution.
    def in_map(s, i):
        return (jnp.minimum(s * steps_per_split + i, last_blk), 0)

    def out_map(s, i):
        return (s, 0, 0)

    kernel = functools.partial(
        _focal_loss_kernel, gamma=float(gamma), n_rows=n,
        tile_rows=tile_n, steps_per_split=steps_per_split)

    cost = pl.CostEstimate(
        flops=6 * n * c,
        transcendentals=n * c + 2 * n,
        bytes_accessed=n * c * itemsize + n * 4 + num_splits * 8 * 128 * 4,
    )

    out = pl.pallas_call(
        kernel,
        out_shape=jax.ShapeDtypeStruct((num_splits, 8, 128), jnp.float32),
        grid_spec=pltpu.PrefetchScalarGridSpec(
            num_scalar_prefetch=0,
            grid=(num_splits, steps_per_split),
            in_specs=[
                pl.BlockSpec((tile_n, c), in_map),   # NOTE: C < 128 under-fills lanes;
                pl.BlockSpec((tile_n, 1), in_map),   #       production C >= 128 recommended.
            ],
            out_specs=pl.BlockSpec((1, 8, 128), out_map),
        ),
        compiler_params=pltpu.CompilerParams(
            dimension_semantics=("parallel", "arbitrary"),
            vmem_limit_bytes=vmem_limit),
        cost_estimate=cost,
    )(logits, targets2d)                             # native dtype; kernel upcasts in-vreg

    # Only cell [s, 0, 0] of each split's block is nonzero; reduce + mean here.
    return jnp.sum(out) * jnp.float32(1.0 / n)


def _reference_focal_loss(logits, targets, gamma=GAMMA):
    logp = jax.nn.log_softmax(logits.astype(jnp.float32), axis=-1)
    ce = -jnp.take_along_axis(logp, targets[:, None].astype(jnp.int32), axis=-1)[:, 0]
    pt = jnp.exp(-ce)
    return jnp.mean((1.0 - pt) ** gamma * ce)


if __name__ == "__main__":
    key = jax.random.PRNGKey(0)
    k1, k2, k3, k4, k5, k6 = jax.random.split(key, 6)

    # Case 1: small batch, 32 classes, f32.
    N, C = 8, 32
    logits = jax.random.normal(k1, (N, C), dtype=jnp.float32)
    targets = jax.random.randint(k2, (N,), 0, C, dtype=jnp.int32)
    loss = jax.block_until_ready(focal_loss(logits, targets))
    ref = _reference_focal_loss(logits, targets)
    assert jnp.allclose(loss, ref, rtol=1e-5, atol=1e-5), (loss, ref)

    # Case 2: N not a multiple of the row tile (exercises remainder masking).
    N2, C2 = 13, 32
    logits2 = jax.random.normal(k3, (N2, C2), dtype=jnp.float32)
    targets2 = jax.random.randint(k4, (N2,), 0, C2, dtype=jnp.int32)
    loss2 = jax.block_until_ready(focal_loss(logits2, targets2))
    ref2 = _reference_focal_loss(logits2, targets2)
    assert jnp.allclose(loss2, ref2, rtol=1e-5, atol=1e-5), (loss2, ref2)

    # Case 3: bf16 logits (exercises native-dtype DMA + in-vreg f32 upcast).
    N3, C3 = 32, 48
    logits3 = jax.random.normal(k5, (N3, C3), dtype=jnp.float32).astype(jnp.bfloat16)
    targets3 = jax.random.randint(k6, (N3,), 0, C3, dtype=jnp.int32)
    loss3 = jax.block_until_ready(focal_loss(logits3, targets3))
    ref3 = _reference_focal_loss(logits3, targets3)
    assert jnp.allclose(loss3, ref3, rtol=1e-3, atol=1e-4), (loss3, ref3)

    print("KERNEL_OK")
</pallas_src>

<mosaic_0001>
module attributes {stable_mosaic.version = 11 : i64} {
  func.func @_focal_loss_kernel(%arg0: i32, %arg1: i32, %arg2: memref<8x32xf32, #tpu.memory_space<vmem>>, %arg3: memref<8x1xi32, #tpu.memory_space<vmem>>, %arg4: memref<1x8x128xf32, #tpu.memory_space<vmem>>) attributes {dimension_semantics = [#tpu.dimension_semantics<parallel>, #tpu.dimension_semantics<arbitrary>], iteration_bounds = array<i64: 1, 1>, scalar_prefetch = 0 : i64, scratch_operands = 0 : i64, tpu.core_type = #tpu.core_type<tc>, window_params = [{transform_indices = @transform_0, window_bounds = array<i64: 8, 32>}, {transform_indices = @transform_1, window_bounds = array<i64: 8, 1>}, {transform_indices = @transform_2, window_bounds = array<i64: 1, 8, 128>}]} {
    %c0_i32 = arith.constant 0 : i32
    %0 = arith.cmpi eq, %arg1, %c0_i32 : i32
    %1 = arith.extui %0 : i1 to i32
    %c0_i32_0 = arith.constant 0 : i32
    %2 = arith.cmpi ne, %1, %c0_i32_0 : i32
    scf.if %2 {
      %cst_18 = arith.constant 0.000000e+00 : f32
      %50 = vector.broadcast %cst_18 : f32 to vector<1x8x128xf32>
      %c0_19 = arith.constant 0 : index
      %c0_20 = arith.constant 0 : index
      %c0_21 = arith.constant 0 : index
      %51 = vector.load %arg4[%c0_19, %c0_20, %c0_21] : memref<1x8x128xf32, #tpu.memory_space<vmem>>, vector<1x8x128xf32>
      tpu.vector_store %arg4[%c0_19, %c0_20, %c0_21], %50 {strides = array<i32>} : memref<1x8x128xf32, #tpu.memory_space<vmem>>, vector<1x8x128xf32>,
    } else {
    }
    %c0 = arith.constant 0 : index
    %c0_1 = arith.constant 0 : index
    %3 = vector.load %arg2[%c0, %c0_1] : memref<8x32xf32, #tpu.memory_space<vmem>>, vector<8x32xf32>
    %c0_2 = arith.constant 0 : index
    %c0_3 = arith.constant 0 : index
    %4 = vector.load %arg3[%c0_2, %c0_3] : memref<8x1xi32, #tpu.memory_space<vmem>>, vector<8x1xi32>
    %cst = arith.constant dense<0xFF800000> : vector<8xf32>
    %5 = vector.multi_reduction <maximumf>, %3, %cst [1] : vector<8x32xf32> to vector<8xf32>
    %6 = vector.shape_cast %5 : vector<8xf32> to vector<8x1xf32>
    %7 = vector.broadcast %6 : vector<8x1xf32> to vector<8x32xf32>
    %8 = arith.subf %3, %7 : vector<8x32xf32>
    %9 = math.exp %8 : vector<8x32xf32>
    %cst_4 = arith.constant dense<0.000000e+00> : vector<8xf32>
    %10 = vector.multi_reduction <add>, %9, %cst_4 [1] : vector<8x32xf32> to vector<8xf32>
    %11 = vector.shape_cast %10 : vector<8xf32> to vector<8x1xf32>
    %12 = tpu.iota {dimensions = array<i32: 1>} : vector<8x32xi32>
    %13 = vector.broadcast %4 : vector<8x1xi32> to vector<8x32xi32>
    %14 = arith.cmpi eq, %12, %13 : vector<8x32xi32>
    %cst_5 = arith.constant 0.000000e+00 : f32
    %15 = vector.broadcast %cst_5 : f32 to vector<8x32xf32>
    %16 = arith.select %14, %3, %15 : vector<8x32xi1>, vector<8x32xf32>
    %cst_6 = arith.constant dense<0.000000e+00> : vector<8xf32>
    %17 = vector.multi_reduction <add>, %16, %cst_6 [1] : vector<8x32xf32> to vector<8xf32>
    %18 = vector.shape_cast %17 : vector<8xf32> to vector<8x1xf32>
    %19 = math.log %11 : vector<8x1xf32>
    %20 = arith.addf %19, %6 : vector<8x1xf32>
    %21 = arith.subf %20, %18 : vector<8x1xf32>
    %cst_7 = arith.constant 0.000000e+00 : f32
    %22 = vector.broadcast %cst_7 : f32 to vector<8x1xf32>
    %23 = arith.subf %22, %21 : vector<8x1xf32>
    %24 = math.exp %23 : vector<8x1xf32>
    %cst_8 = arith.constant 1.000000e+00 : f32
    %25 = vector.broadcast %cst_8 : f32 to vector<8x1xf32>
    %26 = arith.subf %25, %24 : vector<8x1xf32>
    %27 = arith.mulf %26, %26 : vector<8x1xf32>
    %28 = arith.mulf %27, %21 : vector<8x1xf32>
    %c1_i32 = arith.constant 1 : i32
    %29 = arith.muli %arg0, %c1_i32 : i32
    %30 = arith.addi %29, %arg1 : i32
    %c8_i32 = arith.constant 8 : i32
    %31 = arith.muli %30, %c8_i32 : i32
    %32 = tpu.iota {dimensions = array<i32: 0>} : vector<8x1xi32>
    %33 = vector.broadcast %31 : i32 to vector<8x1xi32>
    %34 = arith.addi %33, %32 : vector<8x1xi32>
    %c8_i32_9 = arith.constant 8 : i32
    %35 = vector.broadcast %c8_i32_9 : i32 to vector<8x1xi32>
    %36 = arith.cmpi slt, %34, %35 : vector<8x1xi32>
    %cst_10 = arith.constant 0.000000e+00 : f32
    %37 = vector.broadcast %cst_10 : f32 to vector<8x1xf32>
    %38 = arith.select %36, %28, %37 : vector<8x1xi1>, vector<8x1xf32>
    %39 = vector.shape_cast %38 : vector<8x1xf32> to vector<1x8x1xf32>
    %cst_11 = arith.constant dense<0.000000e+00> : vector<1xf32>
    %40 = vector.multi_reduction <add>, %39, %cst_11 [1, 2] : vector<1x8x1xf32> to vector<1xf32>
    %41 = vector.shape_cast %40 : vector<1xf32> to vector<1x1x1xf32>
    %42 = vector.extract %41[0, 0, 0] : f32 from vector<1x1x1xf32>
    %43 = vector.broadcast %42 : f32 to vector<1x1xf32>
    %c0_12 = arith.constant 0 : index
    %c0_13 = arith.constant 0 : index
    %c0_14 = arith.constant 0 : index
    %44 = vector.load %arg4[%c0_12, %c0_13, %c0_14] : memref<1x8x128xf32, #tpu.memory_space<vmem>>, vector<1x1x1xf32>
    %45 = vector.shape_cast %44 : vector<1x1x1xf32> to vector<1x1xf32>
    %46 = arith.addf %45, %43 : vector<1x1xf32>
    %c0_15 = arith.constant 0 : index
    %c0_16 = arith.constant 0 : index
    %c0_17 = arith.constant 0 : index
    %47 = vector.load %arg4[%c0_15, %c0_16, %c0_17] : memref<1x8x128xf32, #tpu.memory_space<vmem>>, vector<1x1x1xf32>
    %48 = vector.shape_cast %47 : vector<1x1x1xf32> to vector<1x1xf32>
    %49 = vector.shape_cast %46 : vector<1x1xf32> to vector<1x1x1xf32>
    tpu.vector_store %arg4[%c0_15, %c0_16, %c0_17], %49 {strides = array<i32>} : memref<1x8x128xf32, #tpu.memory_space<vmem>>, vector<1x1x1xf32>,
    return
  }
  func.func @transform_0(%arg0: i32, %arg1: i32) -> (i32, i32) {
    %c1_i32 = arith.constant 1 : i32
    %0 = arith.muli %arg0, %c1_i32 : i32
    %1 = arith.addi %0, %arg1 : i32
    %c0_i32 = arith.constant 0 : i32
    %2 = arith.minsi %1, %c0_i32 : i32
    %c0_i32_0 = arith.constant 0 : i32
    %c0_i32_1 = arith.constant 0 : i32
    return %2, %c0_i32_0 : i32, i32
  }
  func.func @transform_1(%arg0: i32, %arg1: i32) -> (i32, i32) {
    %c1_i32 = arith.constant 1 : i32
    %0 = arith.muli %arg0, %c1_i32 : i32
    %1 = arith.addi %0, %arg1 : i32
    %c0_i32 = arith.constant 0 : i32
    %2 = arith.minsi %1, %c0_i32 : i32
    %c0_i32_0 = arith.constant 0 : i32
    %c0_i32_1 = arith.constant 0 : i32
    return %2, %c0_i32_0 : i32, i32
  }
  func.func @transform_2(%arg0: i32, %arg1: i32) -> (i32, i32, i32) {
    %c0_i32 = arith.constant 0 : i32
    %c0_i32_0 = arith.constant 0 : i32
    %c0_i32_1 = arith.constant 0 : i32
    return %arg0, %c0_i32, %c0_i32_0 : i32, i32, i32
  }
}

</mosaic_0001>

<llo_original>
// kernel: tpu_custom_call.1
$region0: #{tpu_custom_call.1}
  #allocation0 [shape = 'u32[]', space=smem, size = 0x4, offset = 0x4, fixed_abs, tag = 'smem constant byte address 0x4 - core index']
  #allocation1 [shape = 'u32[72,128]{1,0:T(1,128)}', space=vmem, size = 0x9000, scoped, tag = 'internal scratch']
  %s0 = inlined_call_operand.vmem [shape: f32[8,32], index: 0, kind: input, shape index: {}]
  %s1 = inlined_call_operand.vmem [shape: s32[8,1], index: 1, kind: input, shape index: {}]
  %s2 = inlined_call_operand.hbm [shape: f32[1,8,128], index: 2, kind: output, shape index: {}]
  %s3 = sld [smem:[#allocation0]]
  $region22: #{tpu_custom_call.1} parent=0
    _
  %s5 = ssub.s32 1, %s3
  %s6 = scalar_select 0, %s5, %s3
  $region1: #{tpu_custom_call.1} parent=0
    #allocation2 [shape = 'u8[4096]{0}', space=vmem, size = 0x1000, scoped, tag = 'output window, operand 0, single buffered']
    #allocation3 [shape = 's32[1]{0}', space=sflag, size = 0x4, scoped, tag = 'scoped memory for tpu_custom_call.1']
    %7 = vsyncpa [#allocation3], 0
    // Predicated region
    $region2: #{tpu_custom_call.1} parent=1 // pred_check
      _
    $region3: #{tpu_custom_call.1} parent=1 // pred_check_branch
      %9 = sbr.rel (0) target = $region5
    $region4: #{tpu_custom_call.1} parent=1 // pred_region
      %s10 = sadd.s32 0, 0
      %p11 = scmp.lt.s32.totalorder %s10, 0
      %s12 = scalar_select %p11, %s10, 0
      %p13 = scmp.lt.s32.totalorder %s12, 0
      %s14 = scalar_select %p13, %s12, 0
      %s15 = smul.addr %s14, 8
      %s16 = scalar_lea.vmem %s0, %s15
      %s17 = sadd.s32 0, 0
      %p18 = scmp.lt.s32.totalorder %s17, 0
      %s19 = scalar_select %p18, %s17, 0
    $region5: #{tpu_custom_call.1} parent=1 // pred_fallthru
      _
    // Predicated region
    $region6: #{tpu_custom_call.1} parent=1 // pred_check
      _
    $region7: #{tpu_custom_call.1} parent=1 // pred_check_branch
      %21 = sbr.rel (0) target = $region9
    $region8: #{tpu_custom_call.1} parent=1 // pred_region
      %s22 = sadd.s32 0, 0
      %p23 = scmp.lt.s32.totalorder %s22, 0
      %s24 = scalar_select %p23, %s22, 0
      %p25 = scmp.lt.s32.totalorder %s24, 0
      %s26 = scalar_select %p25, %s24, 0
      %s27 = smul.addr %s26, 8
      %s28 = scalar_lea.vmem %s1, %s27
      %s29 = sadd.s32 0, 0
      %p30 = scmp.lt.s32.totalorder %s29, 0
      %s31 = scalar_select %p30, %s29, 0
    $region9: #{tpu_custom_call.1} parent=1 // pred_fallthru
      _
    %s32 = sadd.s32 0, 0
    %p33 = scmp.lt.s32.totalorder %s32, 0
    %s34 = scalar_select %p33, %s32, 0
    %p35 = scmp.lt.s32.totalorder %s34, 0
    %s36 = scalar_select %p35, %s34, 0
    %s37 = smul.addr %s36, 8
    %s38 = scalar_lea.vmem %s0, %s37
    %s39 = sadd.s32 0, 0
    %p40 = scmp.lt.s32.totalorder %s39, 0
    %s41 = scalar_select %p40, %s39, 0
    %p42 = scmp.lt.s32.totalorder %s41, 0
    %s43 = scalar_select %p42, %s41, 0
    %s44 = smul.addr %s43, 8
    %s45 = scalar_lea.vmem %s1, %s44
    %s46 = sadd.s32 0, 0
    %p47 = scmp.lt.s32.totalorder %s46, 0
    %s48 = scalar_select %p47, %s46, 0
    %p49 = scmp.lt.s32.totalorder %s48, 0
    %s50 = scalar_select %p49, %s48, 0
    %s51 = smul.addr %s50, 8
    %s52 = scalar_lea.vmem %s0, %s51
    %s53 = sadd.s32 0, 0
    %p54 = scmp.lt.s32.totalorder %s53, 0
    %s55 = scalar_select %p54, %s53, 0
    %s56 = sadd.s32 0, 0
    %p57 = scmp.lt.s32.totalorder %s56, 0
    %s58 = scalar_select %p57, %s56, 0
    %p59 = scmp.lt.s32.totalorder %s58, 0
    %s60 = scalar_select %p59, %s58, 0
    %s61 = smul.addr %s60, 8
    %s62 = scalar_lea.vmem %s1, %s61
    %s63 = sadd.s32 0, 0
    %p64 = scmp.lt.s32.totalorder %s63, 0
    %s65 = scalar_select %p64, %s63, 0
    %p66 = scmp.eq.s32.totalorder 0, 0
    // Predicated region
    $region10: #{tpu_custom_call.1} parent=1 // pred_check
      %p67 = pneg %p66
    $region11: #{tpu_custom_call.1} parent=1 // pred_check_branch
      %69 = sbr.rel (%p67) target = $region13
    $region12: #{tpu_custom_call.1} parent=1 // pred_region
      %70 = vst [vmem:[#allocation2] sm:$0xff] 0.0
    $region13: #{tpu_custom_call.1} parent=1 // pred_fallthru
      _
    %v71 = vld [vmem:[%s52] sm:$0xff]
    %v72 = vld [vmem:[%s62] sm:$0xff]
    %vm73 = vcmask 261120
    %v74 = vsel %vm73, %v71, -inf
    %75 = vmax.xlane.f32.xlu0 %v74
    %v76 = vpop.xlane.xlu0 %75
    %v77 = vsub.f32 %v71, %v76
    %v78 = vmul.f32 %v77, 1.442695
    %v79 = vpow.pop %v78
    %v80 = vsel %vm73, %v79, 0.0
    %81 = vadd.xlane.f32.xlu0 %v80
    %v82 = vpop.xlane.xlu0 %81
    %v83 = vlaneseq
    %v84 = vand.u32 %v83, 127
    %85 = vset.pattern.permute.xlu0 0
    %86 = vperm.xlu0 %85, %v72
    %v87 = vpop.permute.xlu0 %86
    %vm88 = vcmp.eq.s32.totalorder %v84, %v87
    %v89 = vsel %vm88, %v71, 0.0
    %v90 = vsel %vm73, %v89, 0.0
    %91 = vadd.xlane.f32.xlu0 %v90
    %v92 = vpop.xlane.xlu0 %91
    %v93 = vlog2.pop %v82
    %v94 = vmul.f32 %v93, 0.6931472
    %v95 = vadd.f32 %v94, %v76
    %v96 = vsub.f32 %v95, %v92
    %v97 = vsub.f32 0.0, %v96
    %v98 = vmul.f32 %v97, 1.442695
    %v99 = vpow.pop %v98
    %v100 = vsub.f32 1.0, %v99
    %v101 = vmul.f32 %v100, %v100
    %v102 = vmul.f32 %v101, %v96
    %s103 = sadd.s32 0, 0
    %s104 = smul.u32 %s103, 8
    %v105 = vlaneseq
    %v106 = vshrl.u32 %v105, 7
    %v107 = vstv %s104
    %v108 = vadd.s32 %v107, %v106
    %vm109 = vcmp.lt.s32.totalorder %v108, 8
    %v110 = vsel %vm109, %v102, 0.0
    %vm111 = vcmask 7168
    %v112 = vsel %vm111, %v110, 0.0
    %113 = vadd.xlane.f32.xlu0 %v112
    %v114 = vpop.xlane.xlu0 %113
    %v115 = vrot.slane %v114, 4
    %v116 = vadd.f32 %v114, %v115
    %v117 = vrot.slane %v116, 2
    %v118 = vadd.f32 %v116, %v117
    %v119 = vrot.slane %v118, 1
    %v120 = vadd.f32 %v118, %v119
    %s121 = vtos %v120
    %v122 = vstv %s121
    %v123 = vld [vmem:[#allocation2] sm:$0x1]
    %v124 = vadd.f32 %v123, %v122
    %vm125 = vcmask 0
    %126 = vst.msk [vmem:[#allocation2] sm:$0x1] %vm125, %v124
    // Predicated region
    $region14: #{tpu_custom_call.1} parent=1 // pred_check
      _
    $region15: #{tpu_custom_call.1} parent=1 // pred_check_branch
      %128 = sbr.rel (0) target = $region17
    $region16: #{tpu_custom_call.1} parent=1 // pred_region
      %130 = vsyncadd [#allocation3], 0
      %s132 = sshll.u32 [#allocation2], 4
      %s133 = int_to_ptr.vmem [resolvable:$true] %s132
      %s134 = sshll.u32 %s2, 4
      %s135 = int_to_ptr.hbm [resolvable:$true] %s134
      %137 = dma.vmem_to_hbm [thread:$0]  %s133, 128, %s135, [#allocation3]
    $region17: #{tpu_custom_call.1} parent=1 // pred_fallthru
      _
    // Predicated region
    $region18: #{tpu_custom_call.1} parent=1 // pred_check
      _
    $region19: #{tpu_custom_call.1} parent=1 // pred_check_branch
      %139 = sbr.rel (0) target = $region21
    $region20: #{tpu_custom_call.1} parent=1 // pred_region
      %141 = dma.done [#allocation3], 128
    $region21: #{tpu_custom_call.1} parent=1 // pred_fallthru
      _
    %142 = vsyncpa [#allocation3], 1

</llo_original>
